<compile_context>
chip_gen: v7x
topology: tpu7x:2x2x1
jax: 0.10.0
libtpu: 0.0.40
codegen_flags: <defaults>
</compile_context>

<pallas_src>
import functools
import math

import jax
import jax.numpy as jnp
from jax.experimental import pallas as pl
from jax.experimental.pallas import tpu as pltpu


def _chip_block_defaults():
    """Per-generation block sizing: (target block bytes, minor tile cap).

    The op is memory-bound, so the only lever is amortizing the ~0.35 us/step
    grid cost against HBM bandwidth: v7x (~3.2 TB/s) wants ~4 MiB blocks,
    v6e (~1.4 TB/s) ~2 MiB, v5e (~0.8 TB/s) is already fine at 1 MiB.
    Tile caps are multiples of 128 so a tile is valid in either the lane or
    the sublane slot of a block.
    """
    kind = ""
    try:
        kind = jax.devices()[0].device_kind.lower()
    except Exception:
        pass
    if "v5 lite" in kind or "v5e" in kind or "v5lite" in kind:
        return 1 << 20, 512
    if "v6" in kind or "trillium" in kind:
        return 2 << 20, 1024
    if "7" in kind:                       # v7x
        return 4 << 20, 1024
    return 2 << 20, 512                   # conservative default (v4 / unknown)


_TARGET_BLOCK_BYTES, _MINOR_TILE_CAP = _chip_block_defaults()
_VMEM_LIMIT_BYTES = 32 << 20     # explicit scoped-VMEM limit (raises v5e's 16 MiB
                                 # default; 2 arrays x 2 buffers x <=4 MiB fits)
_SMALL_BYTES = 1 << 20           # below this, XLA's fused relayout wins
_MIN_AUTO_BLOCK_BYTES = 256 << 10  # auto path declines smaller per-step blocks
                                   # (grid-step overhead would dominate the DMA)
_LANE_DENSE = 128                # auto path requires a lane-dense output


# ----------------------------------------------------------------------------
# Kernels
# ----------------------------------------------------------------------------

def _transpose_last2_kernel(x_ref, o_ref):
    # (TB, t0, t1) -> (TB, t1, t0): batched minor-two-dim transpose (XLU path).
    o_ref[...] = jnp.swapaxes(x_ref[...], 1, 2)


def _copy_kernel(x_ref, o_ref):
    # Straight copy; the axis swap lives entirely in the output index_map.
    o_ref[...] = x_ref[...]


# ----------------------------------------------------------------------------
# Tiling helpers
# ----------------------------------------------------------------------------

def _round_down_128(v):
    return max(128, (v // 128) * 128)


def _pick_transpose_tiles(s0, s1, itemsize):
    """Tiles for the trailing-pair kernel.  Each tile must be valid in BOTH the
    lane and the sublane slot (the output block is the transposed input block),
    so a tile is either the full extent or a multiple of 128, and the per-block
    bytes are capped at the per-generation target."""
    cap = _MINOR_TILE_CAP
    t0 = s0 if s0 <= cap else cap
    t1 = s1 if s1 <= cap else cap
    while t0 * t1 * itemsize > _TARGET_BLOCK_BYTES and max(t0, t1) > 128:
        if t0 >= t1:
            t0 = _round_down_128(t0 // 2)
        else:
            t1 = _round_down_128(t1 // 2)
    return t0, t1


def _split_tail(tail, itemsize):
    """Factor the untouched trailing extent `tail` into (tail1, tail2) so that
    tail2 is the block's full-extent lane dim (lane-dense, contiguous DMA) and
    tail1 can be tiled in the sublane slot.  The split is a free reshape since
    the tail is contiguous in memory."""
    if tail * itemsize <= _TARGET_BLOCK_BYTES:
        return 1, tail
    lane_cap = max(_LANE_DENSE, _TARGET_BLOCK_BYTES // itemsize // 8)
    best = 1
    i = 1
    while i * i <= tail:
        if tail % i == 0:
            for cand in (i, tail // i):
                if best < cand <= lane_cap:
                    best = cand
        i += 1
    return tail // best, best


# ----------------------------------------------------------------------------
# Pallas paths (return None to decline -> caller falls back to XLA)
# ----------------------------------------------------------------------------

def _swap_trailing_pair(x, force):
    """Swap the last two dims with the batched minor-two-dim transpose kernel."""
    *lead, s0, s1 = x.shape
    if not force and min(s0, s1) < _LANE_DENSE:
        # A sub-128 minor dim leaves most of every vreg empty and forces masked
        # partial stores; XLA's fused relayout wins by a large factor here.
        return None
    b = math.prod(lead) if lead else 1
    x3 = x.reshape(b, s0, s1)                        # free reshape (collapse)
    itemsize = x.dtype.itemsize

    t0, t1 = _pick_transpose_tiles(s0, s1, itemsize)
    # Batch leading elements until the block reaches the per-generation target.
    tb = min(b, max(1, _TARGET_BLOCK_BYTES // (t0 * t1 * itemsize)))

    grid = (pl.cdiv(b, tb), pl.cdiv(s0, t0), pl.cdiv(s1, t1))
    y3 = pl.pallas_call(
        _transpose_last2_kernel,
        out_shape=jax.ShapeDtypeStruct((b, s1, s0), x.dtype),
        grid=grid,
        in_specs=[pl.BlockSpec((tb, t0, t1), lambda bb, i, j: (bb, i, j))],
        # Output block index swaps (i, j): the tile lands transposed in place.
        out_specs=pl.BlockSpec((tb, t1, t0), lambda bb, i, j: (bb, j, i)),
        compiler_params=pltpu.CompilerParams(
            dimension_semantics=("parallel", "parallel", "parallel"),
            vmem_limit_bytes=_VMEM_LIMIT_BYTES),
    )(x3)
    return y3.reshape(*lead, s1, s0)                 # free reshape (split)


def _swap_non_last(x, d0, d1, force):
    """Swap dims d0 < d1 < ndim-1.  The contiguous tail (everything after d1,
    including the lane dim) is untouched, so the swap is a pure HBM->HBM copy
    whose permutation lives in the output BlockSpec index_map (input read once,
    output written once, no in-kernel data rearrangement)."""
    shape = x.shape
    itemsize = x.dtype.itemsize
    pre = math.prod(shape[:d0])
    a = shape[d0]
    mid = math.prod(shape[d0 + 1:d1])
    b = shape[d1]
    tail = math.prod(shape[d1 + 1:])

    # Fold ALL untouched trailing dims into (tail1, tail2): tail2 is the
    # full-extent lane axis of the block (unmasked, lane-dense stores and long
    # contiguous DMA runs), tail1 is tiled in the sublane slot.
    tail1, tail2 = _split_tail(tail, itemsize)

    if not force and tail2 < _LANE_DENSE:
        return None                                  # lane-narrow: let XLA relayout

    cell = tail2 * itemsize
    max_rows = max(1, _TARGET_BLOCK_BYTES // cell)
    if tail1 <= max_rows:
        t_t1 = tail1                                  # full extent
    elif max_rows >= 32:
        t_t1 = min(tail1, (max_rows // 32) * 32)      # 32 | every dtype granule
    else:
        t_t1 = min(tail1, 8)                          # stay within the byte budget
    cell_rows = t_t1 * cell
    # Batch leading dims that keep their relative position to amortize the
    # fixed per-grid-step cost.
    t_m = min(mid, max(1, _TARGET_BLOCK_BYTES // cell_rows))
    t_p = min(pre, max(1, _TARGET_BLOCK_BYTES // (cell_rows * t_m)))

    block_bytes = t_p * t_m * cell_rows
    if not force and block_bytes < _MIN_AUTO_BLOCK_BYTES:
        # The swapped dims dominate the shape: size-1 blocks on both of them
        # would explode the grid (0.35 us/step >> per-step DMA time).  XLA's
        # fused transpose handles this regime better than a per-element grid.
        return None

    x6 = x.reshape(pre, a, mid, b, tail1, tail2)      # free reshape (collapse)
    block = (t_p, 1, t_m, 1, t_t1, tail2)
    grid = (pl.cdiv(pre, t_p), a, pl.cdiv(mid, t_m), b, pl.cdiv(tail1, t_t1))
    out6 = pl.pallas_call(
        _copy_kernel,
        out_shape=jax.ShapeDtypeStruct((pre, b, mid, a, tail1, tail2), x.dtype),
        grid=grid,
        in_specs=[pl.BlockSpec(
            block, lambda p, ia, m, ib, t: (p, ia, m, ib, t, 0))],
        # Output block index swaps the a/b positions: the copy lands permuted.
        out_specs=pl.BlockSpec(
            block, lambda p, ia, m, ib, t: (p, ib, m, ia, t, 0)),
        compiler_params=pltpu.CompilerParams(
            dimension_semantics=("parallel",) * 5,
            vmem_limit_bytes=_VMEM_LIMIT_BYTES),
    )(x6)

    out_shape = list(shape)
    out_shape[d0], out_shape[d1] = out_shape[d1], out_shape[d0]
    return out6.reshape(out_shape)                    # free reshape (split)


# ----------------------------------------------------------------------------
# Dispatch
# ----------------------------------------------------------------------------

@functools.partial(jax.jit, static_argnums=(1, 2, 3))
def _transpose_impl(x, dim0, dim1, force_pallas):
    nd = x.ndim
    d0 = dim0 % nd
    d1 = dim1 % nd
    if d0 == d1:
        return x
    d0, d1 = min(d0, d1), max(d0, d1)

    if not force_pallas and x.size * x.dtype.itemsize < _SMALL_BYTES:
        # Small-tensor fast path: pallas_call fixed cost dwarfs the data
        # movement, so let XLA's fused relayout handle it.
        return jnp.swapaxes(x, d0, d1)

    if d0 == nd - 2 and d1 == nd - 1:
        y = _swap_trailing_pair(x, force_pallas)
        if y is not None:
            return y
        return jnp.swapaxes(x, d0, d1)

    if d1 < nd - 1:
        y = _swap_non_last(x, d0, d1, force_pallas)
        if y is not None:
            return y
        return jnp.swapaxes(x, d0, d1)

    # d1 == nd-1 and d0 < nd-2: non-adjacent swap involving the lane axis.
    # TODO(synk): a single-pass kernel here needs a lane<->major in-kernel
    # transpose that Mosaic does not lower reliably; XLA's single fused
    # transpose (2x HBM traffic) beats moveaxis+Pallas (4x), so the auto path
    # defers to XLA and only the forced/demo path exercises the Pallas kernel.
    if force_pallas:
        y = jnp.moveaxis(x, d0, nd - 2)
        z = _swap_trailing_pair(y, True)
        if z is not None:
            return jnp.moveaxis(z, nd - 2, d0)
    return jnp.swapaxes(x, d0, d1)


def transpose_pallas(x, dim0, dim1, *, force_pallas=False):
    """Equivalent of torch.Tensor.transpose(dim0, dim1)."""
    return _transpose_impl(x, int(dim0), int(dim1), bool(force_pallas))


class Transpose:
    """Mirror of the PyTorch module (no parameters); perm = (dim0, dim1)."""

    def __init__(self, perm):
        self.perm = tuple(perm)

    def __call__(self, x, *, force_pallas=False):
        return transpose_pallas(x, self.perm[0], self.perm[1],
                                force_pallas=force_pallas)


if __name__ == "__main__":
    key = jax.random.PRNGKey(0)
    # NCHW activations, as the PyTorch conv pipeline feeding this module produces.
    x = jax.random.normal(key, (2, 4, 16, 16), dtype=jnp.float32)

    # perm=(2,3): H <-> W — trailing-pair Pallas transpose kernel (forced; the
    # auto path would hand such a tiny, lane-narrow tensor to XLA).
    out = jax.block_until_ready(Transpose((2, 3))(x, force_pallas=True))
    ref = jnp.swapaxes(x, 2, 3)
    assert out.shape == ref.shape and out.dtype == ref.dtype
    assert bool(jnp.all(out == ref))

    # perm=(1,2): C <-> H — index_map-only copy kernel (lane axis untouched).
    out2 = jax.block_until_ready(Transpose((1, 2))(x, force_pallas=True))
    assert bool(jnp.all(out2 == jnp.swapaxes(x, 1, 2)))

    # perm=(0,3): non-adjacent swap involving the lane axis (forced path:
    # moveaxis + trailing-pair kernel; auto path: XLA fused transpose).
    out3 = jax.block_until_ready(Transpose((0, 3))(x, force_pallas=True))
    assert bool(jnp.all(out3 == jnp.swapaxes(x, 0, 3)))

    # Auto path on the tiny tensor: small/lane-narrow -> XLA fast path.
    out4 = jax.block_until_ready(Transpose((2, 3))(x))
    assert bool(jnp.all(out4 == ref))

    # Auto path on a lane-dense tensor big enough to claim the Pallas kernel.
    xb = jax.random.normal(jax.random.PRNGKey(1), (4, 256, 256), dtype=jnp.float32)
    out5 = jax.block_until_ready(Transpose((1, 2))(xb))
    assert bool(jnp.all(out5 == jnp.swapaxes(xb, 1, 2)))

    print("KERNEL_OK")
</pallas_src>

<mosaic_0001>
module attributes {stable_mosaic.version = 11 : i64} {
  func.func @_transpose_last2_kernel(%arg0: i32, %arg1: i32, %arg2: i32, %arg3: memref<8x16x16xf32, #tpu.memory_space<vmem>>, %arg4: memref<8x16x16xf32, #tpu.memory_space<vmem>>) attributes {dimension_semantics = [#tpu.dimension_semantics<parallel>, #tpu.dimension_semantics<parallel>, #tpu.dimension_semantics<parallel>], iteration_bounds = array<i64: 1, 1, 1>, scalar_prefetch = 0 : i64, scratch_operands = 0 : i64, tpu.core_type = #tpu.core_type<tc>, window_params = [{transform_indices = @transform_0, window_bounds = array<i64: 8, 16, 16>}, {transform_indices = @transform_1, window_bounds = array<i64: 8, 16, 16>}]} {
    %c0 = arith.constant 0 : index
    %c0_0 = arith.constant 0 : index
    %c0_1 = arith.constant 0 : index
    %0 = vector.load %arg3[%c0, %c0_0, %c0_1] : memref<8x16x16xf32, #tpu.memory_space<vmem>>, vector<8x16x16xf32>
    %1 = tpu.transpose %0, [0, 2, 1] : vector<8x16x16xf32> -> vector<8x16x16xf32>
    %c0_2 = arith.constant 0 : index
    %c0_3 = arith.constant 0 : index
    %c0_4 = arith.constant 0 : index
    %2 = vector.load %arg4[%c0_2, %c0_3, %c0_4] : memref<8x16x16xf32, #tpu.memory_space<vmem>>, vector<8x16x16xf32>
    tpu.vector_store %arg4[%c0_2, %c0_3, %c0_4], %1 {strides = array<i32>} : memref<8x16x16xf32, #tpu.memory_space<vmem>>, vector<8x16x16xf32>,
    return
  }
  func.func @transform_0(%arg0: i32, %arg1: i32, %arg2: i32) -> (i32, i32, i32) {
    %c0_i32 = arith.constant 0 : i32
    return %arg0, %arg1, %arg2 : i32, i32, i32
  }
  func.func @transform_1(%arg0: i32, %arg1: i32, %arg2: i32) -> (i32, i32, i32) {
    %c0_i32 = arith.constant 0 : i32
    return %arg0, %arg2, %arg1 : i32, i32, i32
  }
}

</mosaic_0001>

<llo_original>
// kernel: _transpose_impl.1
$region0: #{_transpose_impl.1}
  #allocation0 [shape = 'u32[]', space=smem, size = 0x4, offset = 0x4, fixed_abs, tag = 'smem constant byte address 0x4 - core index']
  #allocation1 [shape = 'u32[144,128]{1,0:T(1,128)}', space=vmem, size = 0x12000, scoped, tag = 'internal scratch']
  %s0 = inlined_call_operand.hbm [shape: f32[8,16,16], index: 0, kind: input, shape index: {}]
  %s1 = inlined_call_operand.hbm [shape: f32[8,16,16], index: 1, kind: output, shape index: {}]
  %s2 = sld [smem:[#allocation0]]
  $region18: #{_transpose_impl.1} parent=0
    _
  %s4 = ssub.s32 1, %s2
  %s5 = scalar_select 0, %s4, %s2
  $region1: #{_transpose_impl.1} parent=0
    #allocation2 [shape = 'u8[65536]{0}', space=vmem, size = 0x10000, scoped, tag = 'input window, operand 0, single buffered']
    #allocation3 [shape = 's32[1]{0}', space=sflag, size = 0x4, scoped, tag = 'scoped memory for _transpose_impl.1']
    #allocation4 [shape = 's32[1]{0}', space=sflag, size = 0x4, scoped, tag = 'scoped memory for _transpose_impl.1']
    #allocation5 [shape = 'u8[65536]{0}', space=vmem, size = 0x10000, scoped, tag = 'output window, operand 0, single buffered']
    %6 = vsyncpa [#allocation3], 0
    %7 = vsyncpa [#allocation4], 0
    // Predicated region
    $region2: #{_transpose_impl.1} parent=1 // pred_check
      _
    $region3: #{_transpose_impl.1} parent=1 // pred_check_branch
      %9 = sbr.rel (0) target = $region5
    $region4: #{_transpose_impl.1} parent=1 // pred_region
      %s11 = ssub.s32 2048, 2048
      %12 = vsyncadd [#allocation3], %s11
      %s13 = sshll.u32 [#allocation2], 4
      %s14 = int_to_ptr.vmem [resolvable:$true] %s13
      %19 = dma.hbm_to_vmem [thread:$0]  %s0, 2048, %s14, [#allocation3], 128, 128, 8
    $region5: #{_transpose_impl.1} parent=1 // pred_fallthru
      _
    // Predicated region
    $region6: #{_transpose_impl.1} parent=1 // pred_check
      _
    $region7: #{_transpose_impl.1} parent=1 // pred_check_branch
      %21 = sbr.rel (0) target = $region9
    $region8: #{_transpose_impl.1} parent=1 // pred_region
      %22 = dma.done [#allocation3], 2048
    $region9: #{_transpose_impl.1} parent=1 // pred_fallthru
      _
    %v23 = vld [vmem:[#allocation2] sm:$0xff]
    %v24 = vld [vmem:[#allocation2 + $0x8] sm:$0xff]
    %v25 = vld [vmem:[#allocation2 + $0x10] sm:$0xff]
    %v26 = vld [vmem:[#allocation2 + $0x18] sm:$0xff]
    %v27 = vld [vmem:[#allocation2 + $0x20] sm:$0xff]
    %v28 = vld [vmem:[#allocation2 + $0x28] sm:$0xff]
    %v29 = vld [vmem:[#allocation2 + $0x30] sm:$0xff]
    %v30 = vld [vmem:[#allocation2 + $0x38] sm:$0xff]
    %v31 = vld [vmem:[#allocation2 + $0x40] sm:$0xff]
    %v32 = vld [vmem:[#allocation2 + $0x48] sm:$0xff]
    %v33 = vld [vmem:[#allocation2 + $0x50] sm:$0xff]
    %v34 = vld [vmem:[#allocation2 + $0x58] sm:$0xff]
    %v35 = vld [vmem:[#allocation2 + $0x60] sm:$0xff]
    %v36 = vld [vmem:[#allocation2 + $0x68] sm:$0xff]
    %v37 = vld [vmem:[#allocation2 + $0x70] sm:$0xff]
    %v38 = vld [vmem:[#allocation2 + $0x78] sm:$0xff]
    %39 = vxpose.xlu0.b32.start [1/16] %v23, 128
    %40 = vxpose.xlu0.b32.cont [2/16] %v24, 128
    %41 = vxpose.xlu0.b32.cont [3/16] 0.0, 128
    %42 = vxpose.xlu0.b32.cont [4/16] 0.0, 128
    %43 = vxpose.xlu0.b32.cont [5/16] 0.0, 128
    %44 = vxpose.xlu0.b32.cont [6/16] 0.0, 128
    %45 = vxpose.xlu0.b32.cont [7/16] 0.0, 128
    %46 = vxpose.xlu0.b32.cont [8/16] 0.0, 128
    %47 = vxpose.xlu0.b32.cont [9/16] 0.0, 128
    %48 = vxpose.xlu0.b32.cont [10/16] 0.0, 128
    %49 = vxpose.xlu0.b32.cont [11/16] 0.0, 128
    %50 = vxpose.xlu0.b32.cont [12/16] 0.0, 128
    %51 = vxpose.xlu0.b32.cont [13/16] 0.0, 128
    %52 = vxpose.xlu0.b32.cont [14/16] 0.0, 128
    %53 = vxpose.xlu0.b32.cont [15/16] 0.0, 128
    %54 = vxpose.xlu0.b32.end [16/16] 0.0, 128
    %v55 = vpop.trf.xlu0
    %v56 = vpop.trf.xlu0
    %v57 = vpop.trf.xlu0
    %v58 = vpop.trf.xlu0
    %v59 = vpop.trf.xlu0
    %v60 = vpop.trf.xlu0
    %v61 = vpop.trf.xlu0
    %v62 = vpop.trf.xlu0
    %v63 = vpop.trf.xlu0
    %v64 = vpop.trf.xlu0
    %v65 = vpop.trf.xlu0
    %v66 = vpop.trf.xlu0
    %v67 = vpop.trf.xlu0
    %v68 = vpop.trf.xlu0
    %v69 = vpop.trf.xlu0
    %v70 = vpop.trf.xlu0
    %71 = vxpose.xlu0.b32.start [1/16] %v25, 128
    %72 = vxpose.xlu0.b32.cont [2/16] %v26, 128
    %73 = vxpose.xlu0.b32.cont [3/16] 0.0, 128
    %74 = vxpose.xlu0.b32.cont [4/16] 0.0, 128
    %75 = vxpose.xlu0.b32.cont [5/16] 0.0, 128
    %76 = vxpose.xlu0.b32.cont [6/16] 0.0, 128
    %77 = vxpose.xlu0.b32.cont [7/16] 0.0, 128
    %78 = vxpose.xlu0.b32.cont [8/16] 0.0, 128
    %79 = vxpose.xlu0.b32.cont [9/16] 0.0, 128
    %80 = vxpose.xlu0.b32.cont [10/16] 0.0, 128
    %81 = vxpose.xlu0.b32.cont [11/16] 0.0, 128
    %82 = vxpose.xlu0.b32.cont [12/16] 0.0, 128
    %83 = vxpose.xlu0.b32.cont [13/16] 0.0, 128
    %84 = vxpose.xlu0.b32.cont [14/16] 0.0, 128
    %85 = vxpose.xlu0.b32.cont [15/16] 0.0, 128
    %86 = vxpose.xlu0.b32.end [16/16] 0.0, 128
    %v87 = vpop.trf.xlu0
    %v88 = vpop.trf.xlu0
    %v89 = vpop.trf.xlu0
    %v90 = vpop.trf.xlu0
    %v91 = vpop.trf.xlu0
    %v92 = vpop.trf.xlu0
    %v93 = vpop.trf.xlu0
    %v94 = vpop.trf.xlu0
    %v95 = vpop.trf.xlu0
    %v96 = vpop.trf.xlu0
    %v97 = vpop.trf.xlu0
    %v98 = vpop.trf.xlu0
    %v99 = vpop.trf.xlu0
    %v100 = vpop.trf.xlu0
    %v101 = vpop.trf.xlu0
    %v102 = vpop.trf.xlu0
    %103 = vxpose.xlu0.b32.start [1/16] %v27, 128
    %104 = vxpose.xlu0.b32.cont [2/16] %v28, 128
    %105 = vxpose.xlu0.b32.cont [3/16] 0.0, 128
    %106 = vxpose.xlu0.b32.cont [4/16] 0.0, 128
    %107 = vxpose.xlu0.b32.cont [5/16] 0.0, 128
    %108 = vxpose.xlu0.b32.cont [6/16] 0.0, 128
    %109 = vxpose.xlu0.b32.cont [7/16] 0.0, 128
    %110 = vxpose.xlu0.b32.cont [8/16] 0.0, 128
    %111 = vxpose.xlu0.b32.cont [9/16] 0.0, 128
    %112 = vxpose.xlu0.b32.cont [10/16] 0.0, 128
    %113 = vxpose.xlu0.b32.cont [11/16] 0.0, 128
    %114 = vxpose.xlu0.b32.cont [12/16] 0.0, 128
    %115 = vxpose.xlu0.b32.cont [13/16] 0.0, 128
    %116 = vxpose.xlu0.b32.cont [14/16] 0.0, 128
    %117 = vxpose.xlu0.b32.cont [15/16] 0.0, 128
    %118 = vxpose.xlu0.b32.end [16/16] 0.0, 128
    %v119 = vpop.trf.xlu0
    %v120 = vpop.trf.xlu0
    %v121 = vpop.trf.xlu0
    %v122 = vpop.trf.xlu0
    %v123 = vpop.trf.xlu0
    %v124 = vpop.trf.xlu0
    %v125 = vpop.trf.xlu0
    %v126 = vpop.trf.xlu0
    %v127 = vpop.trf.xlu0
    %v128 = vpop.trf.xlu0
    %v129 = vpop.trf.xlu0
    %v130 = vpop.trf.xlu0
    %v131 = vpop.trf.xlu0
    %v132 = vpop.trf.xlu0
    %v133 = vpop.trf.xlu0
    %v134 = vpop.trf.xlu0
    %135 = vxpose.xlu0.b32.start [1/16] %v29, 128
    %136 = vxpose.xlu0.b32.cont [2/16] %v30, 128
    %137 = vxpose.xlu0.b32.cont [3/16] 0.0, 128
    %138 = vxpose.xlu0.b32.cont [4/16] 0.0, 128
    %139 = vxpose.xlu0.b32.cont [5/16] 0.0, 128
    %140 = vxpose.xlu0.b32.cont [6/16] 0.0, 128
    %141 = vxpose.xlu0.b32.cont [7/16] 0.0, 128
    %142 = vxpose.xlu0.b32.cont [8/16] 0.0, 128
    %143 = vxpose.xlu0.b32.cont [9/16] 0.0, 128
    %144 = vxpose.xlu0.b32.cont [10/16] 0.0, 128
    %145 = vxpose.xlu0.b32.cont [11/16] 0.0, 128
    %146 = vxpose.xlu0.b32.cont [12/16] 0.0, 128
    %147 = vxpose.xlu0.b32.cont [13/16] 0.0, 128
    %148 = vxpose.xlu0.b32.cont [14/16] 0.0, 128
    %149 = vxpose.xlu0.b32.cont [15/16] 0.0, 128
    %150 = vxpose.xlu0.b32.end [16/16] 0.0, 128
    %v151 = vpop.trf.xlu0
    %v152 = vpop.trf.xlu0
    %v153 = vpop.trf.xlu0
    %v154 = vpop.trf.xlu0
    %v155 = vpop.trf.xlu0
    %v156 = vpop.trf.xlu0
    %v157 = vpop.trf.xlu0
    %v158 = vpop.trf.xlu0
    %v159 = vpop.trf.xlu0
    %v160 = vpop.trf.xlu0
    %v161 = vpop.trf.xlu0
    %v162 = vpop.trf.xlu0
    %v163 = vpop.trf.xlu0
    %v164 = vpop.trf.xlu0
    %v165 = vpop.trf.xlu0
    %v166 = vpop.trf.xlu0
    %167 = vxpose.xlu0.b32.start [1/16] %v31, 128
    %168 = vxpose.xlu0.b32.cont [2/16] %v32, 128
    %169 = vxpose.xlu0.b32.cont [3/16] 0.0, 128
    %170 = vxpose.xlu0.b32.cont [4/16] 0.0, 128
    %171 = vxpose.xlu0.b32.cont [5/16] 0.0, 128
    %172 = vxpose.xlu0.b32.cont [6/16] 0.0, 128
    %173 = vxpose.xlu0.b32.cont [7/16] 0.0, 128
    %174 = vxpose.xlu0.b32.cont [8/16] 0.0, 128
    %175 = vxpose.xlu0.b32.cont [9/16] 0.0, 128
    %176 = vxpose.xlu0.b32.cont [10/16] 0.0, 128
    %177 = vxpose.xlu0.b32.cont [11/16] 0.0, 128
    %178 = vxpose.xlu0.b32.cont [12/16] 0.0, 128
    %179 = vxpose.xlu0.b32.cont [13/16] 0.0, 128
    %180 = vxpose.xlu0.b32.cont [14/16] 0.0, 128
    %181 = vxpose.xlu0.b32.cont [15/16] 0.0, 128
    %182 = vxpose.xlu0.b32.end [16/16] 0.0, 128
    %v183 = vpop.trf.xlu0
    %v184 = vpop.trf.xlu0
    %v185 = vpop.trf.xlu0
    %v186 = vpop.trf.xlu0
    %v187 = vpop.trf.xlu0
    %v188 = vpop.trf.xlu0
    %v189 = vpop.trf.xlu0
    %v190 = vpop.trf.xlu0
    %v191 = vpop.trf.xlu0
    %v192 = vpop.trf.xlu0
    %v193 = vpop.trf.xlu0
    %v194 = vpop.trf.xlu0
    %v195 = vpop.trf.xlu0
    %v196 = vpop.trf.xlu0
    %v197 = vpop.trf.xlu0
    %v198 = vpop.trf.xlu0
    %199 = vxpose.xlu0.b32.start [1/16] %v33, 128
    %200 = vxpose.xlu0.b32.cont [2/16] %v34, 128
    %201 = vxpose.xlu0.b32.cont [3/16] 0.0, 128
    %202 = vxpose.xlu0.b32.cont [4/16] 0.0, 128
    %203 = vxpose.xlu0.b32.cont [5/16] 0.0, 128
    %204 = vxpose.xlu0.b32.cont [6/16] 0.0, 128
    %205 = vxpose.xlu0.b32.cont [7/16] 0.0, 128
    %206 = vxpose.xlu0.b32.cont [8/16] 0.0, 128
    %207 = vxpose.xlu0.b32.cont [9/16] 0.0, 128
    %208 = vxpose.xlu0.b32.cont [10/16] 0.0, 128
    %209 = vxpose.xlu0.b32.cont [11/16] 0.0, 128
    %210 = vxpose.xlu0.b32.cont [12/16] 0.0, 128
    %211 = vxpose.xlu0.b32.cont [13/16] 0.0, 128
    %212 = vxpose.xlu0.b32.cont [14/16] 0.0, 128
    %213 = vxpose.xlu0.b32.cont [15/16] 0.0, 128
    %214 = vxpose.xlu0.b32.end [16/16] 0.0, 128
    %v215 = vpop.trf.xlu0
    %v216 = vpop.trf.xlu0
    %v217 = vpop.trf.xlu0
    %v218 = vpop.trf.xlu0
    %v219 = vpop.trf.xlu0
    %v220 = vpop.trf.xlu0
    %v221 = vpop.trf.xlu0
    %v222 = vpop.trf.xlu0
    %v223 = vpop.trf.xlu0
    %v224 = vpop.trf.xlu0
    %v225 = vpop.trf.xlu0
    %v226 = vpop.trf.xlu0
    %v227 = vpop.trf.xlu0
    %v228 = vpop.trf.xlu0
    %v229 = vpop.trf.xlu0
    %v230 = vpop.trf.xlu0
    %231 = vxpose.xlu0.b32.start [1/16] %v35, 128
    %232 = vxpose.xlu0.b32.cont [2/16] %v36, 128
    %233 = vxpose.xlu0.b32.cont [3/16] 0.0, 128
    %234 = vxpose.xlu0.b32.cont [4/16] 0.0, 128
    %235 = vxpose.xlu0.b32.cont [5/16] 0.0, 128
    %236 = vxpose.xlu0.b32.cont [6/16] 0.0, 128
    %237 = vxpose.xlu0.b32.cont [7/16] 0.0, 128
    %238 = vxpose.xlu0.b32.cont [8/16] 0.0, 128
    %239 = vxpose.xlu0.b32.cont [9/16] 0.0, 128
    %240 = vxpose.xlu0.b32.cont [10/16] 0.0, 128
    %241 = vxpose.xlu0.b32.cont [11/16] 0.0, 128
    %242 = vxpose.xlu0.b32.cont [12/16] 0.0, 128
    %243 = vxpose.xlu0.b32.cont [13/16] 0.0, 128
    %244 = vxpose.xlu0.b32.cont [14/16] 0.0, 128
    %245 = vxpose.xlu0.b32.cont [15/16] 0.0, 128
    %246 = vxpose.xlu0.b32.end [16/16] 0.0, 128
    %v247 = vpop.trf.xlu0
    %v248 = vpop.trf.xlu0
    %v249 = vpop.trf.xlu0
    %v250 = vpop.trf.xlu0
    %v251 = vpop.trf.xlu0
    %v252 = vpop.trf.xlu0
    %v253 = vpop.trf.xlu0
    %v254 = vpop.trf.xlu0
    %v255 = vpop.trf.xlu0
    %v256 = vpop.trf.xlu0
    %v257 = vpop.trf.xlu0
    %v258 = vpop.trf.xlu0
    %v259 = vpop.trf.xlu0
    %v260 = vpop.trf.xlu0
    %v261 = vpop.trf.xlu0
    %v262 = vpop.trf.xlu0
    %263 = vxpose.xlu0.b32.start [1/16] %v37, 128
    %264 = vxpose.xlu0.b32.cont [2/16] %v38, 128
    %265 = vxpose.xlu0.b32.cont [3/16] 0.0, 128
    %266 = vxpose.xlu0.b32.cont [4/16] 0.0, 128
    %267 = vxpose.xlu0.b32.cont [5/16] 0.0, 128
    %268 = vxpose.xlu0.b32.cont [6/16] 0.0, 128
    %269 = vxpose.xlu0.b32.cont [7/16] 0.0, 128
    %270 = vxpose.xlu0.b32.cont [8/16] 0.0, 128
    %271 = vxpose.xlu0.b32.cont [9/16] 0.0, 128
    %272 = vxpose.xlu0.b32.cont [10/16] 0.0, 128
    %273 = vxpose.xlu0.b32.cont [11/16] 0.0, 128
    %274 = vxpose.xlu0.b32.cont [12/16] 0.0, 128
    %275 = vxpose.xlu0.b32.cont [13/16] 0.0, 128
    %276 = vxpose.xlu0.b32.cont [14/16] 0.0, 128
    %277 = vxpose.xlu0.b32.cont [15/16] 0.0, 128
    %278 = vxpose.xlu0.b32.end [16/16] 0.0, 128
    %v279 = vpop.trf.xlu0
    %v280 = vpop.trf.xlu0
    %v281 = vpop.trf.xlu0
    %v282 = vpop.trf.xlu0
    %v283 = vpop.trf.xlu0
    %v284 = vpop.trf.xlu0
    %v285 = vpop.trf.xlu0
    %v286 = vpop.trf.xlu0
    %v287 = vpop.trf.xlu0
    %v288 = vpop.trf.xlu0
    %v289 = vpop.trf.xlu0
    %v290 = vpop.trf.xlu0
    %v291 = vpop.trf.xlu0
    %v292 = vpop.trf.xlu0
    %v293 = vpop.trf.xlu0
    %v294 = vpop.trf.xlu0
    %vm295 = vcmask 130048
    %296 = vst.msk [vmem:[#allocation5] sm:$0xff] %vm295, %v55
    %297 = vst.msk [vmem:[#allocation5 + $0x8] sm:$0xff] %vm295, %v56
    %298 = vst.msk [vmem:[#allocation5 + $0x10] sm:$0xff] %vm295, %v87
    %299 = vst.msk [vmem:[#allocation5 + $0x18] sm:$0xff] %vm295, %v88
    %300 = vst.msk [vmem:[#allocation5 + $0x20] sm:$0xff] %vm295, %v119
    %301 = vst.msk [vmem:[#allocation5 + $0x28] sm:$0xff] %vm295, %v120
    %302 = vst.msk [vmem:[#allocation5 + $0x30] sm:$0xff] %vm295, %v151
    %303 = vst.msk [vmem:[#allocation5 + $0x38] sm:$0xff] %vm295, %v152
    %304 = vst.msk [vmem:[#allocation5 + $0x40] sm:$0xff] %vm295, %v183
    %305 = vst.msk [vmem:[#allocation5 + $0x48] sm:$0xff] %vm295, %v184
    %306 = vst.msk [vmem:[#allocation5 + $0x50] sm:$0xff] %vm295, %v215
    %307 = vst.msk [vmem:[#allocation5 + $0x58] sm:$0xff] %vm295, %v216
    %308 = vst.msk [vmem:[#allocation5 + $0x60] sm:$0xff] %vm295, %v247
    %309 = vst.msk [vmem:[#allocation5 + $0x68] sm:$0xff] %vm295, %v248
    %310 = vst.msk [vmem:[#allocation5 + $0x70] sm:$0xff] %vm295, %v279
    %311 = vst.msk [vmem:[#allocation5 + $0x78] sm:$0xff] %vm295, %v280
    // Predicated region
    $region10: #{_transpose_impl.1} parent=1 // pred_check
      _
    $region11: #{_transpose_impl.1} parent=1 // pred_check_branch
      %313 = sbr.rel (0) target = $region13
    $region12: #{_transpose_impl.1} parent=1 // pred_region
      %s315 = ssub.s32 2048, 2048
      %316 = vsyncadd [#allocation4], %s315
      %s317 = sshll.u32 [#allocation5], 4
      %s318 = int_to_ptr.vmem [resolvable:$true] %s317
      %323 = dma.vmem_to_hbm [thread:$0]  %s318, 2048, %s1, [#allocation4], 128, 128, 8
    $region13: #{_transpose_impl.1} parent=1 // pred_fallthru
      _
    // Predicated region
    $region14: #{_transpose_impl.1} parent=1 // pred_check
      _
    $region15: #{_transpose_impl.1} parent=1 // pred_check_branch
      %325 = sbr.rel (0) target = $region17
    $region16: #{_transpose_impl.1} parent=1 // pred_region
      %326 = dma.done [#allocation4], 2048
    $region17: #{_transpose_impl.1} parent=1 // pred_fallthru
      _
    %327 = vsyncpa [#allocation3], 1
    %328 = vsyncpa [#allocation4], 1

</llo_original>
